<compile_context>
chip_gen: v6e
topology: v6e:2x2x1
jax: 0.10.0
libtpu: 0.0.40
codegen_flags: <defaults>
</compile_context>

<pallas_src>
import functools

import jax
import jax.numpy as jnp
from jax import lax
from jax.experimental import pallas as pl
from jax.experimental.pallas import tpu as pltpu


# ----------------------------------------------------------------------------
# Pallas kernels
# ----------------------------------------------------------------------------
def _conv_tile(x_ref, w_ref, b_ref, *, tile_h, W):
    """3x3 SAME conv + bias + ReLU on one haloed row tile of one image.

    x_ref: (1, tile_h+2, W+2, Cin) bf16  -- spatially pre-padded row slab
                                            (2-row vertical halo included).
    w_ref: (9*Cin, Cout)           bf16  -- tap-major im2col weights.
    b_ref: (1, Cout)               f32
    Returns the (tile_h*W, Cout) bf16 activation tile.
    """
    Cin = x_ref.shape[-1]
    # Everything stays bf16 until the MXU (perf review): the im2col slicing /
    # lane-concat / major-dim-merge reshape acts on bf16 taps, so the
    # (tile_h*W, 9*Cin) patches intermediate is half the VMEM of the old f32
    # version and the two full-tensor VPU cast passes are gone.
    x = x_ref[0]                                            # (tile_h+2, W+2, Cin)
    taps = [x[kh:kh + tile_h, kw:kw + W, :] for kh in range(3) for kw in range(3)]
    patches = jnp.concatenate(taps, axis=-1).reshape(tile_h * W, 9 * Cin)
    # Single fused MXU matmul, K = 9*Cin, bf16 operands, f32 accumulation.
    acc = jnp.dot(patches, w_ref[...], preferred_element_type=jnp.float32)
    act = jnp.maximum(acc + b_ref[...], 0.0)
    return act.astype(jnp.bfloat16)


def _gram_accumulate(act_bf, gram_ref):
    """gram_ref += act_bf^T @ act_bf (contraction over the tile's HW rows).

    bf16 operands / f32 accumulation; the lhs contraction is expressed with
    dot_general dims ((0,),(0,)) so no (tile_h*W, C) transpose is materialized.
    The (1, C, C) output block index depends only on the batch grid axis, so
    it stays VMEM-resident across the row-tile ('arbitrary') axis and is
    written back to HBM once per image.
    """
    @pl.when(pl.program_id(1) == 0)
    def _():
        gram_ref[...] = jnp.zeros_like(gram_ref)

    g = lax.dot_general(act_bf, act_bf, (((0,), (0,)), ((), ())),
                        preferred_element_type=jnp.float32)   # (Cout, Cout)
    gram_ref[0] = gram_ref[0] + g


def _conv_relu_gram_kernel(x_ref, w_ref, b_ref, act_ref, gram_ref, *, tile_h, W):
    """Conv+ReLU tile; writes the activation tile AND accumulates its gram."""
    act_bf = _conv_tile(x_ref, w_ref, b_ref, tile_h=tile_h, W=W)
    act_ref[0] = act_bf
    _gram_accumulate(act_bf, gram_ref)


def _conv_relu_gram_only_kernel(x_ref, w_ref, b_ref, gram_ref, *, tile_h, W):
    """Conv+ReLU tile; gram only -- activations never leave VMEM."""
    act_bf = _conv_tile(x_ref, w_ref, b_ref, tile_h=tile_h, W=W)
    _gram_accumulate(act_bf, gram_ref)


# ----------------------------------------------------------------------------
# Wrappers (glue in plain JAX)
# ----------------------------------------------------------------------------
# Leave headroom below v7x's 64 MiB physical VMEM (review item); per-step
# tiles are budgeted to ~12 MiB, so the default scoped limit usually suffices.
_VMEM_LIMIT = 48 * 1024 * 1024
_TILE_VMEM_BUDGET = 12 * 1024 * 1024


def _round_up(n, m):
    return -(-n // m) * m


def _est_tile_vmem_bytes(tile_h, W, Cin, Cout):
    """Rough per-grid-step VMEM estimate; budgets the 128-lane padding of the
    (< 128) Cin / Cout minor dims, per the perf review."""
    cin_l = _round_up(Cin, 128)
    cout_l = _round_up(Cout, 128)
    k_l = _round_up(9 * Cin, 128)
    m = tile_h * W
    in_blk = 2 * (tile_h + 2) * (W + 2) * cin_l * 2        # bf16 slab, double-buffered
    patches = m * k_l * 2                                   # bf16 im2col patches
    conv_acc = m * cout_l * 4 + m * cout_l * 2              # f32 matmul acc + bf16 act
    act_out = 2 * m * cout_l * 2                            # double-buffered output block
    gram_out = Cout * cout_l * 4
    weights = k_l * Cout * 2 + cout_l * 4
    return in_blk + patches + conv_acc + act_out + gram_out + weights


def _choose_tile_h(H, W, Cin, Cout, budget=_TILE_VMEM_BUDGET):
    """Largest row-tile height that divides H, keeps the activation block's
    second-minor dim a multiple of 8, and fits the per-step VMEM budget."""
    best = None
    for t in range(1, H + 1):
        if H % t:
            continue
        if (t * W) % 8 and t != H:
            continue
        if _est_tile_vmem_bytes(t, W, Cin, Cout) <= budget:
            best = t
    return 1 if best is None else best


def _halo_row_tiles(xp, tile_h):
    """(N, H+2, W+2, Cin) padded images -> (N*n_t, tile_h+2, W+2, Cin) haloed
    row slabs (2 halo rows duplicated per tile), so the kernel grid can use
    plain Blocked BlockSpecs.

    TODO(synk): this costs one extra XLA pass over the input in HBM; with an
    element-indexed (overlapping) BlockSpec row offset the slabs could be
    DMA'd straight out of the padded image instead.
    """
    N, Hp2, Wp2, Cin = xp.shape
    n_t = (Hp2 - 2) // tile_h
    slabs = [lax.slice_in_dim(xp, i * tile_h, i * tile_h + tile_h + 2, axis=1)
             for i in range(n_t)]
    return jnp.stack(slabs, axis=1).reshape(N * n_t, tile_h + 2, Wp2, Cin)


def conv3x3_relu_gram(x_nhwc, w, b, *, tile_h=None, emit_act=True):
    """Fused 3x3 SAME conv + bias + ReLU + per-image gram accumulation.

    x_nhwc: (N, H, W, Cin) float; w: (3, 3, Cin, Cout); b: (Cout,).
    Returns (act, gram):
      act : (N, H*W, Cout) bf16 post-ReLU activations (gram-ready layout; the
            next conv only needs a metadata reshape).  None if emit_act=False
            (e.g. the last VGG layer, whose activations feed nothing else and
            therefore never touch HBM).
      gram: (N, Cout, Cout) f32 with gram[n] = act[n]^T @ act[n] (unscaled).
    """
    N, H, W, _ = x_nhwc.shape
    Cout = w.shape[-1]

    # Pad Cin to a multiple of 8 (zero channels -> numerically identical).
    Cin = x_nhwc.shape[-1]
    if Cin % 8:
        pad_c = 8 - Cin % 8
        x_nhwc = jnp.pad(x_nhwc, ((0, 0), (0, 0), (0, 0), (0, pad_c)))
        w = jnp.pad(w, ((0, 0), (0, 0), (0, pad_c), (0, 0)))
        Cin += pad_c

    if tile_h is None:
        tile_h = _choose_tile_h(H, W, Cin, Cout)
    assert H % tile_h == 0, (H, tile_h)
    assert (tile_h * W) % 8 == 0 or tile_h == H, (tile_h, W)
    n_t = H // tile_h

    xp = jnp.pad(x_nhwc, ((0, 0), (1, 1), (1, 1), (0, 0))).astype(jnp.bfloat16)
    xt = _halo_row_tiles(xp, tile_h)                        # (N*n_t, th+2, W+2, Cin)
    w9 = w.reshape(9 * Cin, Cout).astype(jnp.bfloat16)      # tap-major im2col weights
    b2 = b.reshape(1, Cout).astype(jnp.float32)

    # TODO(synk): if DMA is still exposed after tiling, sweep
    # pipeline_mode=pl.Buffered(3) on the slab spec (cheap on v5e/v6e 128 MiB).
    in_specs = [
        pl.BlockSpec((1, tile_h + 2, W + 2, Cin),
                     lambda bi, ri: (bi * n_t + ri, 0, 0, 0)),
        pl.BlockSpec((9 * Cin, Cout), lambda bi, ri: (0, 0)),
        pl.BlockSpec((1, Cout), lambda bi, ri: (0, 0)),
    ]
    # NOTE: the activation block's last dim is Cout=64 (< 128 lanes); it is
    # kept that way because the next conv consumes it as NHWC.  A lane-dense
    # (H*W/2, 128) repack is a possible follow-up (measure the in-kernel
    # interleave cost first); the VMEM estimate above budgets the 2x padding.
    gram_spec = pl.BlockSpec((1, Cout, Cout), lambda bi, ri: (bi, 0, 0))
    gram_shape = jax.ShapeDtypeStruct((N, Cout, Cout), jnp.float32)

    if emit_act:
        kernel = functools.partial(_conv_relu_gram_kernel, tile_h=tile_h, W=W)
        out_shape = (jax.ShapeDtypeStruct((N, H * W, Cout), jnp.bfloat16),
                     gram_shape)
        out_specs = [pl.BlockSpec((1, tile_h * W, Cout), lambda bi, ri: (bi, ri, 0)),
                     gram_spec]
    else:
        kernel = functools.partial(_conv_relu_gram_only_kernel, tile_h=tile_h, W=W)
        out_shape = gram_shape
        out_specs = gram_spec

    outs = pl.pallas_call(
        kernel,
        out_shape=out_shape,
        grid_spec=pltpu.PrefetchScalarGridSpec(
            num_scalar_prefetch=0,
            # Row-tile (gram-reduction) axis last + 'arbitrary'; the 2B batch
            # axis is 'parallel' so both v7x TensorCores stay busy.
            grid=(N, n_t),
            in_specs=in_specs,
            out_specs=out_specs,
        ),
        compiler_params=pltpu.CompilerParams(
            dimension_semantics=("parallel", "arbitrary"),
            vmem_limit_bytes=_VMEM_LIMIT,
        ),
    )(xt, w9, b2)

    if emit_act:
        act, gram = outs
        return act, gram
    return None, outs


# ----------------------------------------------------------------------------
# TextureLoss forward
# ----------------------------------------------------------------------------
def if_y_then_gray(x_nchw):
    # (B, C, H, W): replicate single luminance channel to 3 channels.
    if x_nchw.shape[1] == 1:
        return jnp.repeat(x_nchw, 3, axis=1)
    return x_nchw


_IMAGENET_MEAN = jnp.array([0.485, 0.456, 0.406], jnp.float32)
_IMAGENET_STD = jnp.array([0.229, 0.224, 0.225], jnp.float32)


def normalize(x_nchw):
    mean = _IMAGENET_MEAN.reshape(1, 3, 1, 1)
    std = _IMAGENET_STD.reshape(1, 3, 1, 1)
    return (x_nchw - mean) / std


def make_vgg_prefix_params(key):
    """Synthetic, deterministic stand-in for VGG19 features.0 / features.2."""
    # TODO(synk): real TextureLoss uses pretrained IMAGENET1K_V1 VGG19 weights
    # (cannot be loaded here: no files / network access).
    k0, k1 = jax.random.split(key)
    w0 = 0.05 * jax.random.normal(k0, (3, 3, 3, 64), jnp.float32)
    b0 = jnp.zeros((64,), jnp.float32)
    w2 = 0.05 * jax.random.normal(k1, (3, 3, 64, 64), jnp.float32)
    b2 = jnp.zeros((64,), jnp.float32)
    return {"w0": w0, "b0": b0, "w2": w2, "b2": b2}


def texture_loss(sr, target, params, weights, *, tile_h=None):
    """sum_l weights[l] * MSELoss(gram(vgg_l(sr)), gram(vgg_l(target)))."""
    B = sr.shape[0]
    # Concatenate sr / target along batch: each VGG layer runs as ONE
    # pallas_call with a 2B 'parallel' grid axis.
    x = jnp.concatenate([if_y_then_gray(sr), if_y_then_gray(target)], axis=0)
    x = jnp.transpose(normalize(x), (0, 2, 3, 1))           # NCHW -> NHWC
    _, H, W, _ = x.shape

    # features.1 (conv1_1 + ReLU): activations feed the next conv, so they are
    # written out; the per-image gram comes for free from the fused epilogue.
    f1, g1 = conv3x3_relu_gram(x, params["w0"], params["b0"],
                               tile_h=tile_h, emit_act=True)
    # features.3 (conv1_2 + ReLU): gram only -- activations never hit HBM.
    f1_nhwc = f1.reshape(2 * B, H, W, f1.shape[-1])         # metadata reshape
    _, g3 = conv3x3_relu_gram(f1_nhwc, params["w2"], params["b2"],
                              tile_h=tile_h, emit_act=False)
    grams = {1: g1, 3: g3}

    # Scaled gram-MSE + layer weighting on tiny (2B, C, C) arrays: plain JAX.
    loss = jnp.float32(0.0)
    for layer, wgt in weights.items():
        g = grams[layer] / jnp.float32(grams[layer].shape[-1] * H * W)
        loss = loss + jnp.mean((g[:B] - g[B:]) ** 2) * jnp.float32(wgt)
    return loss


# ----------------------------------------------------------------------------
# References (pure JAX) for sanity checking
# ----------------------------------------------------------------------------
def _ref_texture_loss(sr, target, params, weights, *, match_bf16):
    """match_bf16=True mirrors the kernels' precision (bf16 MXU operands, f32
    accumulation, bf16 feature storage); False is the original f32 module."""

    def conv(x, w, b):
        if match_bf16:
            x = x.astype(jnp.bfloat16)
            w = w.astype(jnp.bfloat16)
        y = lax.conv_general_dilated(
            x, w, (1, 1), "SAME",
            dimension_numbers=("NHWC", "HWIO", "NHWC"),
            preferred_element_type=jnp.float32)
        y = jnp.maximum(y + b.reshape(1, 1, 1, -1), 0.0)
        if match_bf16:
            y = y.astype(jnp.bfloat16).astype(jnp.float32)
        return y

    def feats(x):
        x = jnp.transpose(x, (0, 2, 3, 1))
        f1 = conv(x, params["w0"], params["b0"])
        f3 = conv(f1, params["w2"], params["b2"])
        return {1: f1, 3: f3}

    def gram(f):
        b, h, w, c = f.shape
        v = f.reshape(b, h * w, c)
        return jnp.einsum("bnc,bnd->bcd", v, v) / (c * h * w)

    sr_f = feats(normalize(if_y_then_gray(sr)))
    tg_f = feats(normalize(if_y_then_gray(target)))
    loss = 0.0
    for layer, wgt in weights.items():
        loss = loss + jnp.mean((gram(sr_f[layer]) - gram(tg_f[layer])) ** 2) * wgt
    return loss


if __name__ == "__main__":
    key = jax.random.PRNGKey(0)
    k_sr, k_tgt, k_params = jax.random.split(key, 3)

    B, C, H, W = 2, 3, 16, 16
    sr = jax.random.uniform(k_sr, (B, C, H, W), jnp.float32)
    target = jax.random.uniform(k_tgt, (B, C, H, W), jnp.float32)

    params = make_vgg_prefix_params(k_params)
    layer_weights = {1: 1.0, 3: 0.8}

    # tile_h=8 -> two haloed row tiles per image: exercises the row tiling and
    # the multi-step gram accumulation even at this small test size.
    loss = jax.block_until_ready(
        texture_loss(sr, target, params, layer_weights, tile_h=8))
    # Auto tile selection (single-tile path at this size).
    loss_auto = jax.block_until_ready(
        texture_loss(sr, target, params, layer_weights))

    # Tight check against a reference mirroring the kernels' mixed precision
    # (bf16 MXU operands / feature storage, f32 accumulation).
    ref_mixed = jax.block_until_ready(
        _ref_texture_loss(sr, target, params, layer_weights, match_bf16=True))
    assert jnp.allclose(loss, ref_mixed, rtol=5e-3, atol=1e-12), (loss, ref_mixed)
    assert jnp.allclose(loss_auto, ref_mixed, rtol=5e-3, atol=1e-12), (loss_auto, ref_mixed)

    # Loose sanity check against the original full-f32 semantics (the gap is
    # only the bf16 operand rounding used for MXU throughput).
    ref_f32 = jax.block_until_ready(
        _ref_texture_loss(sr, target, params, layer_weights, match_bf16=False))
    assert jnp.allclose(loss, ref_f32, rtol=0.25, atol=1e-6), (loss, ref_f32)

    print("KERNEL_OK")
</pallas_src>

<mosaic_0001>
module attributes {stable_mosaic.version = 11 : i64} {
  func.func @_conv_relu_gram_kernel(%arg0: i32, %arg1: i32, %arg2: memref<1x10x18x8xbf16, #tpu.memory_space<vmem>>, %arg3: memref<72x64xbf16, #tpu.memory_space<vmem>>, %arg4: memref<1x64xf32, #tpu.memory_space<vmem>>, %arg5: memref<1x128x64xbf16, #tpu.memory_space<vmem>>, %arg6: memref<1x64x64xf32, #tpu.memory_space<vmem>>) attributes {dimension_semantics = [#tpu.dimension_semantics<parallel>, #tpu.dimension_semantics<arbitrary>], iteration_bounds = array<i64: 4, 2>, scalar_prefetch = 0 : i64, scratch_operands = 0 : i64, tpu.core_type = #tpu.core_type<tc>, window_params = [{transform_indices = @transform_0, window_bounds = array<i64: 1, 10, 18, 8>}, {pipeline_mode = #tpu.pipeline_mode<synchronous>, transform_indices = @transform_1, window_bounds = array<i64: 72, 64>}, {pipeline_mode = #tpu.pipeline_mode<synchronous>, transform_indices = @transform_2, window_bounds = array<i64: 1, 64>}, {transform_indices = @transform_3, window_bounds = array<i64: 1, 128, 64>}, {transform_indices = @transform_4, window_bounds = array<i64: 1, 64, 64>}]} {
    %c0 = arith.constant 0 : index
    %c0_0 = arith.constant 0 : index
    %c0_1 = arith.constant 0 : index
    %c0_2 = arith.constant 0 : index
    %0 = vector.load %arg2[%c0, %c0_0, %c0_1, %c0_2] : memref<1x10x18x8xbf16, #tpu.memory_space<vmem>>, vector<1x10x18x8xbf16>
    %1 = vector.shape_cast %0 : vector<1x10x18x8xbf16> to vector<10x18x8xbf16>
    %2 = vector.extract_strided_slice %1 {offsets = [0, 0, 0], sizes = [8, 16, 8], strides = [1, 1, 1]} : vector<10x18x8xbf16> to vector<8x16x8xbf16>
    %3 = vector.extract_strided_slice %1 {offsets = [0, 1, 0], sizes = [8, 16, 8], strides = [1, 1, 1]} : vector<10x18x8xbf16> to vector<8x16x8xbf16>
    %4 = vector.extract_strided_slice %1 {offsets = [0, 2, 0], sizes = [8, 16, 8], strides = [1, 1, 1]} : vector<10x18x8xbf16> to vector<8x16x8xbf16>
    %5 = vector.extract_strided_slice %1 {offsets = [1, 0, 0], sizes = [8, 16, 8], strides = [1, 1, 1]} : vector<10x18x8xbf16> to vector<8x16x8xbf16>
    %6 = vector.extract_strided_slice %1 {offsets = [1, 1, 0], sizes = [8, 16, 8], strides = [1, 1, 1]} : vector<10x18x8xbf16> to vector<8x16x8xbf16>
    %7 = vector.extract_strided_slice %1 {offsets = [1, 2, 0], sizes = [8, 16, 8], strides = [1, 1, 1]} : vector<10x18x8xbf16> to vector<8x16x8xbf16>
    %8 = vector.extract_strided_slice %1 {offsets = [2, 0, 0], sizes = [8, 16, 8], strides = [1, 1, 1]} : vector<10x18x8xbf16> to vector<8x16x8xbf16>
    %9 = vector.extract_strided_slice %1 {offsets = [2, 1, 0], sizes = [8, 16, 8], strides = [1, 1, 1]} : vector<10x18x8xbf16> to vector<8x16x8xbf16>
    %10 = vector.extract_strided_slice %1 {offsets = [2, 2, 0], sizes = [8, 16, 8], strides = [1, 1, 1]} : vector<10x18x8xbf16> to vector<8x16x8xbf16>
    %11 = tpu.concatenate %2, %3, %4, %5, %6, %7, %8, %9, %10 in 2 : vector<8x16x8xbf16>, vector<8x16x8xbf16>, vector<8x16x8xbf16>, vector<8x16x8xbf16>, vector<8x16x8xbf16>, vector<8x16x8xbf16>, vector<8x16x8xbf16>, vector<8x16x8xbf16>, vector<8x16x8xbf16> -> vector<8x16x72xbf16>
    %12 = vector.shape_cast %11 : vector<8x16x72xbf16> to vector<128x72xbf16>
    %c0_3 = arith.constant 0 : index
    %c0_4 = arith.constant 0 : index
    %13 = vector.load %arg3[%c0_3, %c0_4] : memref<72x64xbf16, #tpu.memory_space<vmem>>, vector<72x64xbf16>
    %cst = arith.constant dense<0.000000e+00> : vector<128x64xf32>
    %14 = tpu.matmul %12, %13, %cst {dimension_numbers = #tpu.dot_dimension_numbers<[1], [0], [0], [1], [0, 0, 1, 1], [], []>} : vector<128x72xbf16>, vector<72x64xbf16>, vector<128x64xf32> -> vector<128x64xf32>
    %c0_5 = arith.constant 0 : index
    %c0_6 = arith.constant 0 : index
    %15 = vector.load %arg4[%c0_5, %c0_6] : memref<1x64xf32, #tpu.memory_space<vmem>>, vector<1x64xf32>
    %16 = vector.broadcast %15 : vector<1x64xf32> to vector<128x64xf32>
    %17 = arith.addf %14, %16 : vector<128x64xf32>
    %cst_7 = arith.constant 0.000000e+00 : f32
    %18 = vector.broadcast %cst_7 : f32 to vector<128x64xf32>
    %19 = arith.maximumf %17, %18 : vector<128x64xf32>
    %20 = arith.truncf %19 : vector<128x64xf32> to vector<128x64xbf16>
    %c0_8 = arith.constant 0 : index
    %c0_9 = arith.constant 0 : index
    %c0_10 = arith.constant 0 : index
    %21 = vector.load %arg5[%c0_8, %c0_9, %c0_10] : memref<1x128x64xbf16, #tpu.memory_space<vmem>>, vector<1x128x64xbf16>
    %22 = vector.shape_cast %21 : vector<1x128x64xbf16> to vector<128x64xbf16>
    %23 = vector.shape_cast %20 : vector<128x64xbf16> to vector<1x128x64xbf16>
    tpu.vector_store %arg5[%c0_8, %c0_9, %c0_10], %23 {strides = array<i32>} : memref<1x128x64xbf16, #tpu.memory_space<vmem>>, vector<1x128x64xbf16>,
    %c0_i32 = arith.constant 0 : i32
    %24 = arith.cmpi eq, %arg1, %c0_i32 : i32
    %25 = arith.extui %24 : i1 to i32
    %c0_i32_11 = arith.constant 0 : i32
    %26 = arith.cmpi ne, %25, %c0_i32_11 : i32
    scf.if %26 {
      %cst_19 = arith.constant 0.000000e+00 : f32
      %34 = vector.broadcast %cst_19 : f32 to vector<1x64x64xf32>
      %c0_20 = arith.constant 0 : index
      %c0_21 = arith.constant 0 : index
      %c0_22 = arith.constant 0 : index
      %35 = vector.load %arg6[%c0_20, %c0_21, %c0_22] : memref<1x64x64xf32, #tpu.memory_space<vmem>>, vector<1x64x64xf32>
      tpu.vector_store %arg6[%c0_20, %c0_21, %c0_22], %34 {strides = array<i32>} : memref<1x64x64xf32, #tpu.memory_space<vmem>>, vector<1x64x64xf32>,
    } else {
    }
    %cst_12 = arith.constant dense<0.000000e+00> : vector<64x64xf32>
    %27 = tpu.matmul %20, %20, %cst_12 {dimension_numbers = #tpu.dot_dimension_numbers<[0], [0], [1], [1], [0, 1, 1, 1], [], []>} : vector<128x64xbf16>, vector<128x64xbf16>, vector<64x64xf32> -> vector<64x64xf32>
    %c0_13 = arith.constant 0 : index
    %c0_14 = arith.constant 0 : index
    %c0_15 = arith.constant 0 : index
    %28 = vector.load %arg6[%c0_13, %c0_14, %c0_15] : memref<1x64x64xf32, #tpu.memory_space<vmem>>, vector<1x64x64xf32>
    %29 = vector.shape_cast %28 : vector<1x64x64xf32> to vector<64x64xf32>
    %30 = arith.addf %29, %27 : vector<64x64xf32>
    %c0_16 = arith.constant 0 : index
    %c0_17 = arith.constant 0 : index
    %c0_18 = arith.constant 0 : index
    %31 = vector.load %arg6[%c0_16, %c0_17, %c0_18] : memref<1x64x64xf32, #tpu.memory_space<vmem>>, vector<1x64x64xf32>
    %32 = vector.shape_cast %31 : vector<1x64x64xf32> to vector<64x64xf32>
    %33 = vector.shape_cast %30 : vector<64x64xf32> to vector<1x64x64xf32>
    tpu.vector_store %arg6[%c0_16, %c0_17, %c0_18], %33 {strides = array<i32>} : memref<1x64x64xf32, #tpu.memory_space<vmem>>, vector<1x64x64xf32>,
    return
  }
  func.func @transform_0(%arg0: i32, %arg1: i32) -> (i32, i32, i32, i32) {
    %c2_i32 = arith.constant 2 : i32
    %0 = arith.muli %arg0, %c2_i32 : i32
    %1 = arith.addi %0, %arg1 : i32
    %c0_i32 = arith.constant 0 : i32
    %c0_i32_0 = arith.constant 0 : i32
    %c0_i32_1 = arith.constant 0 : i32
    %c0_i32_2 = arith.constant 0 : i32
    return %1, %c0_i32, %c0_i32_0, %c0_i32_1 : i32, i32, i32, i32
  }
  func.func @transform_1(%arg0: i32, %arg1: i32) -> (i32, i32) {
    %c0_i32 = arith.constant 0 : i32
    %c0_i32_0 = arith.constant 0 : i32
    %c0_i32_1 = arith.constant 0 : i32
    return %c0_i32, %c0_i32_0 : i32, i32
  }
  func.func @transform_2(%arg0: i32, %arg1: i32) -> (i32, i32) {
    %c0_i32 = arith.constant 0 : i32
    %c0_i32_0 = arith.constant 0 : i32
    %c0_i32_1 = arith.constant 0 : i32
    return %c0_i32, %c0_i32_0 : i32, i32
  }
  func.func @transform_3(%arg0: i32, %arg1: i32) -> (i32, i32, i32) {
    %c0_i32 = arith.constant 0 : i32
    %c0_i32_0 = arith.constant 0 : i32
    return %arg0, %arg1, %c0_i32 : i32, i32, i32
  }
  func.func @transform_4(%arg0: i32, %arg1: i32) -> (i32, i32, i32) {
    %c0_i32 = arith.constant 0 : i32
    %c0_i32_0 = arith.constant 0 : i32
    %c0_i32_1 = arith.constant 0 : i32
    return %arg0, %c0_i32, %c0_i32_0 : i32, i32, i32
  }
}

</mosaic_0001>

<llo_original>
// kernel: tpu_custom_call.1
$region0: #{tpu_custom_call.1}
  #allocation0 [shape = 'u32[]', space=smem, size = 0x4, offset = 0x4, fixed_abs, tag = 'smem constant byte address 0x4 - core index']
  #allocation1 [shape = 'u32[144,128]{1,0:T(1,128)}', space=vmem, size = 0x12000, scoped, tag = 'internal scratch']
  %s0 = inlined_call_operand.vmem [shape: bf16[8,10,18,8], index: 0, kind: input, shape index: {}]
  %s1 = inlined_call_operand.vmem [shape: bf16[72,64], index: 1, kind: input, shape index: {}]
  %s2 = inlined_call_operand.vmem [shape: f32[1,64], index: 2, kind: input, shape index: {}]
  %s3 = inlined_call_operand.vmem [shape: bf16[4,256,64], index: 3, kind: output, shape index: {0}]
  %s4 = inlined_call_operand.hbm [shape: f32[4,64,64], index: 4, kind: output, shape index: {1}]
  %5 = xla_tuple %s3, %s4
  %s6 = sld [smem:[#allocation0]]
  $region57: #{tpu_custom_call.1} parent=0
    _
  %s8 = ssub.s32 1, %s6
  %s9 = scalar_select 0, %s8, %s6
  $region1: #{tpu_custom_call.1} parent=0
    #allocation2 [shape = 'u8[65536]{0}', space=vmem, size = 0x10000, scoped, tag = 'output window, operand 1']
    #allocation3 [shape = 's32[2]{0}', space=sflag, size = 0x8, scoped, tag = 'scoped memory for tpu_custom_call.1']
    %10 = vsyncpa [#allocation3], 0
    %s11 = scalar_lea.sflag [#allocation3], 1
    %12 = vsyncpa %s11, 0
    loop: start=0, step=1, limit=10
    $region2: #{tpu_custom_call.1} parent=1 // loop_pre_header
      _
    $region3: #{tpu_custom_call.1} parent=1 // loop_header
      %s14 = sphi 0, %s18
      %p15 = scmp.ge.s32.totalorder %s14, 10
      %s21 = sphi 0, %s33
      %s22 = sphi 0, %s29
      %s23 = sphi 0, %s21
      %s24 = sphi 0, %s22
      %s25 = sphi 0, %s23
      %s26 = sphi 0, %s24
      %s40 = sphi 0, %s42
      %s43 = sphi 0, %s40
      %s44 = sphi 0, %s43
      %s60 = sphi 0, %s44
      %s64 = sphi 0, %s64
      %s66 = sphi 0, %s64
      %s67 = sphi 0, %s66
      %s81 = sphi 0, %s67
      %s85 = sphi 0, %s85
      %s87 = sphi 0, %s85
      %s88 = sphi 0, %s87
      %s102 = sphi 0, %s88
      %s110 = sphi 0, %s112
      %s113 = sphi 0, %s110
      %s114 = sphi 0, %s113
      %s130 = sphi 0, %s114
      %s136 = sphi 0, %s138
      %s139 = sphi 0, %s136
      %s140 = sphi 0, %s139
      %s156 = sphi 0, %s140
    $region4: #{tpu_custom_call.1} parent=1 // loop_header_branch
      %17 = sbr.rel (%p15) target = $region8
    $region5: #{tpu_custom_call.1} parent=1 // loop_body
      %s19 = ssub.s32 %s14, 1
      %s20 = ssub.s32 %s14, 2
      %s27 = sadd.s32 1, %s22
      %p28 = scmp.ge.s32.totalorder %s27, 2
      %s29 = scalar_select %p28, 0, %s27
      %s30 = sadd.s32 1, %s21
      %s31 = scalar_select %p28, %s30, %s21
      %p32 = scmp.ge.s32.totalorder %s31, 4
      %s33 = scalar_select %p32, 0, %s31
      %s34 = smul.u32 %s21, 2
      %s35 = sadd.s32 %s34, %s22
      %s36 = smul.u32 %s33, 2
      %s37 = sadd.s32 %s36, %s29
      %s38 = ssub.s32 %s35, %s37
      %p39 = scmp.eq.s32.totalorder %s38, 0
      %s41 = sadd.s32 %s40, 1
      %s42 = scalar_select %p39, %s40, %s41
      %p45 = pneg %p39
      %p46 = scmp.eq.s32.totalorder %s14, 7
      %p47 = por %p45, %p46
      %p48 = scmp.ne.s32.totalorder %s40, %s43
      %p49 = scmp.eq.s32.totalorder %s14, 0
      %p50 = por %p48, %p49
      %p51 = scmp.ne.s32.totalorder %s40, %s43
      %p52 = scmp.eq.s32.totalorder %s19, 7
      %p53 = por %p51, %p52
      %p54 = scmp.ne.s32.totalorder %s43, %s44
      %p55 = scmp.eq.s32.totalorder %s19, 0
      %p56 = por %p54, %p55
      %p57 = scmp.ne.s32.totalorder %s43, %s44
      %p58 = scmp.eq.s32.totalorder %s20, 7
      %p59 = por %p57, %p58
      %p61 = scmp.ne.s32.totalorder %s44, %s60
      %p62 = scmp.eq.s32.totalorder %s20, 0
      %p63 = por %p61, %p62
      %s65 = sadd.s32 %s64, 1
      %p68 = scmp.eq.s32.totalorder %s14, 7
      %p69 = scmp.ne.s32.totalorder %s64, %s66
      %p70 = scmp.eq.s32.totalorder %s14, 0
      %p71 = por %p69, %p70
      %p72 = scmp.ne.s32.totalorder %s64, %s66
      %p73 = scmp.eq.s32.totalorder %s19, 7
      %p74 = por %p72, %p73
      %p75 = scmp.ne.s32.totalorder %s66, %s67
      %p76 = scmp.eq.s32.totalorder %s19, 0
      %p77 = por %p75, %p76
      %p78 = scmp.ne.s32.totalorder %s66, %s67
      %p79 = scmp.eq.s32.totalorder %s20, 7
      %p80 = por %p78, %p79
      %p82 = scmp.ne.s32.totalorder %s67, %s81
      %p83 = scmp.eq.s32.totalorder %s20, 0
      %p84 = por %p82, %p83
      %s86 = sadd.s32 %s85, 1
      %p89 = scmp.eq.s32.totalorder %s14, 7
      %p90 = scmp.ne.s32.totalorder %s85, %s87
      %p91 = scmp.eq.s32.totalorder %s14, 0
      %p92 = por %p90, %p91
      %p93 = scmp.ne.s32.totalorder %s85, %s87
      %p94 = scmp.eq.s32.totalorder %s19, 7
      %p95 = por %p93, %p94
      %p96 = scmp.ne.s32.totalorder %s87, %s88
      %p97 = scmp.eq.s32.totalorder %s19, 0
      %p98 = por %p96, %p97
      %p99 = scmp.ne.s32.totalorder %s87, %s88
      %p100 = scmp.eq.s32.totalorder %s20, 7
      %p101 = por %p99, %p100
      %p103 = scmp.ne.s32.totalorder %s88, %s102
      %p104 = scmp.eq.s32.totalorder %s20, 0
      %p105 = por %p103, %p104
      %s106 = ssub.s32 %s21, %s33
      %s107 = ssub.s32 %s22, %s29
      %s108 = sor.u32 %s106, %s107
      %p109 = scmp.eq.s32.totalorder %s108, 0
      %s111 = sadd.s32 %s110, 1
      %s112 = scalar_select %p109, %s110, %s111
      %p115 = pneg %p109
      %p116 = scmp.eq.s32.totalorder %s14, 7
      %p117 = por %p115, %p116
      %p118 = scmp.ne.s32.totalorder %s110, %s113
      %p119 = scmp.eq.s32.totalorder %s14, 0
      %p120 = por %p118, %p119
      %p121 = scmp.ne.s32.totalorder %s110, %s113
      %p122 = scmp.eq.s32.totalorder %s19, 7
      %p123 = por %p121, %p122
      %p124 = scmp.ne.s32.totalorder %s113, %s114
      %p125 = scmp.eq.s32.totalorder %s19, 0
      %p126 = por %p124, %p125
      %p127 = scmp.ne.s32.totalorder %s113, %s114
      %p128 = scmp.eq.s32.totalorder %s20, 7
      %p129 = por %p127, %p128
      %p131 = scmp.ne.s32.totalorder %s114, %s130
      %p132 = scmp.eq.s32.totalorder %s20, 0
      %p133 = por %p131, %p132
      %s134 = ssub.s32 %s21, %s33
      %p135 = scmp.eq.s32.totalorder %s134, 0
      %s137 = sadd.s32 %s136, 1
      %s138 = scalar_select %p135, %s136, %s137
      %p141 = pneg %p135
      %p142 = scmp.eq.s32.totalorder %s14, 7
      %p143 = por %p141, %p142
      %p144 = scmp.ne.s32.totalorder %s136, %s139
      %p145 = scmp.eq.s32.totalorder %s14, 0
      %p146 = por %p144, %p145
      %p147 = scmp.ne.s32.totalorder %s136, %s139
      %p148 = scmp.eq.s32.totalorder %s19, 7
      %p149 = por %p147, %p148
      %p150 = scmp.ne.s32.totalorder %s139, %s140
      %p151 = scmp.eq.s32.totalorder %s19, 0
      %p152 = por %p150, %p151
      %p153 = scmp.ne.s32.totalorder %s139, %s140
      %p154 = scmp.eq.s32.totalorder %s20, 7
      %p155 = por %p153, %p154
      %p157 = scmp.ne.s32.totalorder %s140, %s156
      %p158 = scmp.eq.s32.totalorder %s20, 0
      %p159 = por %p157, %p158
      %p160 = scmp.le.s32.totalorder 1, %s14
      %p161 = scmp.lt.s32.totalorder %s14, 9
      %p162 = pnand %p160, %p161
      %p163 = pneg %p162
      // Predicated region
      $region9: #{tpu_custom_call.1} parent=5 // pred_check
        _
      $region10: #{tpu_custom_call.1} parent=5 // pred_check_branch
        %165 = sbr.rel (%p162) target = $region12
      $region11: #{tpu_custom_call.1} parent=5 // pred_region
        %s166 = ssub.s32 %s14, 1
        // Predicated region
        $region13: #{tpu_custom_call.1} parent=11 // pred_check
          %p167 = pneg %p77
        $region14: #{tpu_custom_call.1} parent=11 // pred_check_branch
          %169 = sbr.rel (%p167) target = $region16
        $region15: #{tpu_custom_call.1} parent=11 // pred_region
          _
        $region16: #{tpu_custom_call.1} parent=11 // pred_fallthru
          _
        // Predicated region
        $region17: #{tpu_custom_call.1} parent=11 // pred_check
          %p170 = pneg %p98
        $region18: #{tpu_custom_call.1} parent=11 // pred_check_branch
          %172 = sbr.rel (%p170) target = $region20
        $region19: #{tpu_custom_call.1} parent=11 // pred_region
          _
        $region20: #{tpu_custom_call.1} parent=11 // pred_fallthru
          _
      $region12: #{tpu_custom_call.1} parent=5 // pred_fallthru
        _
      %p173 = scmp.lt.s32.totalorder %s14, 8
      // Predicated region
      $region21: #{tpu_custom_call.1} parent=5 // pred_check
        %p174 = pneg %p173
      $region22: #{tpu_custom_call.1} parent=5 // pred_check_branch
        %176 = sbr.rel (%p174) target = $region24
      $region23: #{tpu_custom_call.1} parent=5 // pred_region
        // Predicated region
        $region25: #{tpu_custom_call.1} parent=23 // pred_check
          %p177 = pneg %p50
        $region26: #{tpu_custom_call.1} parent=23 // pred_check_branch
          %179 = sbr.rel (%p177) target = $region28
        $region27: #{tpu_custom_call.1} parent=23 // pred_region
          %s180 = smul.u32 %s21, 2
          %s181 = sadd.s32 %s180, %s22
          %p182 = scmp.lt.s32.totalorder %s181, 7
          %s183 = scalar_select %p182, %s181, 7
          %s184 = smul.addr %s183, 30
          %s185 = smul.addr %s184, 4
          %s186 = scalar_lea.vmem %s0, %s185
          %s187 = smul.u32 %s21, 2
          %s188 = sadd.s32 %s187, %s22
        $region28: #{tpu_custom_call.1} parent=23 // pred_fallthru
          _
      $region24: #{tpu_custom_call.1} parent=5 // pred_fallthru
        _
      %p189 = scmp.le.s32.totalorder 1, %s14
      %p190 = scmp.lt.s32.totalorder %s14, 9
      %p191 = pnand %p189, %p190
      %p192 = pneg %p191
      // Predicated region
      $region29: #{tpu_custom_call.1} parent=5 // pred_check
        _
      $region30: #{tpu_custom_call.1} parent=5 // pred_check_branch
        %194 = sbr.rel (%p191) target = $region32
      $region31: #{tpu_custom_call.1} parent=5 // pred_region
        %s195 = ssub.s32 %s14, 1
        %s196 = smul.u32 %s23, 2
        %s197 = sadd.s32 %s196, %s24
        %p198 = scmp.lt.s32.totalorder %s197, 7
        %s199 = scalar_select %p198, %s197, 7
        %s200 = smul.addr %s199, 30
        %s201 = smul.addr %s200, 4
        %s202 = scalar_lea.vmem %s0, %s201
        %p203 = pneg %p56
        %p204 = pneg %p53
        %p205 = pneg %p77
        %p206 = pneg %p74
        %p207 = pneg %p98
        %p208 = pneg %p95
        %p209 = pneg %p126
        %p210 = pneg %p123
        %s211 = smul.u32 16, %s24
        %p212 = scmp.lt.s32.totalorder %s23, 3
        %s213 = scalar_select %p212, %s23, 3
        %p214 = scmp.lt.s32.totalorder %s211, 31
        %s215 = scalar_select %p214, %s211, 31
        %s216 = smul.addr %s213, 32
        %s217 = sadd.s32 %s215, %s216
        %s218 = smul.addr %s217, 4
        %s219 = scalar_lea.vmem %s3, %s218
        %p220 = pneg %p152
        %p221 = pneg %p149
        %s222 = sand.u32 %s139, 1
        %s223 = scalar_lea.sflag [#allocation3], %s222
        %s224 = sand.u32 %s139, 1
        %s225 = smul.addr %s224, 64
        %s226 = scalar_lea.vmem [#allocation2], %s225
        %s227 = smul.u32 %s23, 2
        %s228 = sadd.s32 %s227, %s24
        %p229 = scmp.lt.s32.totalorder %s228, 7
        %s230 = scalar_select %p229, %s228, 7
        %s231 = smul.addr %s230, 30
        %s232 = smul.addr %s231, 4
        %s233 = scalar_lea.vmem %s0, %s232
        %s234 = smul.u32 %s23, 2
        %s235 = sadd.s32 %s234, %s24
        %s236 = smul.u32 16, %s24
        %p237 = scmp.lt.s32.totalorder %s23, 3
        %s238 = scalar_select %p237, %s23, 3
        %p239 = scmp.lt.s32.totalorder %s236, 31
        %s240 = scalar_select %p239, %s236, 31
        %s241 = smul.addr %s238, 32
        %s242 = sadd.s32 %s240, %s241
        %s243 = smul.addr %s242, 4
        %s244 = scalar_lea.vmem %s3, %s243
        %s245 = smul.u32 16, %s24
        %v247 = vld [vmem:[%s233] sm:$0xf]
        %v248 = vld [vmem:[%s233 + $0x4] sm:$0xf]
        %v249 = vld [vmem:[%s233 + $0x8] sm:$0x1]
        %v250 = vld [vmem:[%s233 + $0xc] sm:$0xf]
        %v251 = vld [vmem:[%s233 + $0x10] sm:$0xf]
        %v252 = vld [vmem:[%s233 + $0x14] sm:$0x1]
        %v253 = vld [vmem:[%s233 + $0x18] sm:$0xf]
        %v254 = vld [vmem:[%s233 + $0x1c] sm:$0xf]
        %v255 = vld [vmem:[%s233 + $0x20] sm:$0x1]
        %v256 = vld [vmem:[%s233 + $0x24] sm:$0xf]
        %v257 = vld [vmem:[%s233 + $0x28] sm:$0xf]
        %v258 = vld [vmem:[%s233 + $0x2c] sm:$0x1]
        %v259 = vld [vmem:[%s233 + $0x30] sm:$0xf]
        %v260 = vld [vmem:[%s233 + $0x34] sm:$0xf]
        %v261 = vld [vmem:[%s233 + $0x38] sm:$0x1]
        %v262 = vld [vmem:[%s233 + $0x3c] sm:$0xf]
        %v263 = vld [vmem:[%s233 + $0x40] sm:$0xf]
        %v264 = vld [vmem:[%s233 + $0x44] sm:$0x1]
        %v265 = vld [vmem:[%s233 + $0x48] sm:$0xf]
        %v266 = vld [vmem:[%s233 + $0x4c] sm:$0xf]
        %v267 = vld [vmem:[%s233 + $0x50] sm:$0x1]
        %v268 = vld [vmem:[%s233 + $0x54] sm:$0xf]
        %v269 = vld [vmem:[%s233 + $0x58] sm:$0xf]
        %v270 = vld [vmem:[%s233 + $0x5c] sm:$0x1]
        %v271 = vld [vmem:[%s233 + $0x60] sm:$0xf]
        %v272 = vld [vmem:[%s233 + $0x64] sm:$0xf]
        %v273 = vld [vmem:[%s233 + $0x68] sm:$0x1]
        %v274 = vld [vmem:[%s233 + $0x6c] sm:$0xf]
        %v275 = vld [vmem:[%s233 + $0x70] sm:$0xf]
        %v276 = vld [vmem:[%s233 + $0x74] sm:$0x1]
        %v293 = vunpack.c.l.b16 %v247
        %v294 = vunpack.c.l.b16 %v248
        %v295 = vunpack.c.l.b16 %v250
        %v296 = vunpack.c.l.b16 %v251
        %v297 = vunpack.c.l.b16 %v253
        %v298 = vunpack.c.l.b16 %v254
        %v299 = vunpack.c.l.b16 %v256
        %v300 = vunpack.c.l.b16 %v257
        %v301 = vunpack.c.l.b16 %v259
        %v302 = vunpack.c.l.b16 %v260
        %v303 = vunpack.c.l.b16 %v262
        %v304 = vunpack.c.l.b16 %v263
        %v305 = vunpack.c.l.b16 %v265
        %v306 = vunpack.c.l.b16 %v266
        %v307 = vunpack.c.l.b16 %v268
        %v308 = vunpack.c.l.b16 %v269
        %v309 = vpack.c.b16 %v294, %v293
        %v310 = vpack.c.b16 %v296, %v295
        %v311 = vpack.c.b16 %v298, %v297
        %v312 = vpack.c.b16 %v300, %v299
        %v313 = vpack.c.b16 %v302, %v301
        %v314 = vpack.c.b16 %v304, %v303
        %v315 = vpack.c.b16 %v306, %v305
        %v316 = vpack.c.b16 %v308, %v307
        %v325 = vunpack.c.l.b16 %v249
        %v326 = vunpack.c.l.b16 %v252
        %v327 = vunpack.c.l.b16 %v255
        %v328 = vunpack.c.l.b16 %v258
        %v329 = vunpack.c.l.b16 %v261
        %v330 = vunpack.c.l.b16 %v264
        %v331 = vunpack.c.l.b16 %v267
        %v332 = vunpack.c.l.b16 %v270
        %v333 = vpack.c.b16 %v325, %v325
        %v334 = vpack.c.b16 %v326, %v326
        %v335 = vpack.c.b16 %v327, %v327
        %v336 = vpack.c.b16 %v328, %v328
        %v337 = vpack.c.b16 %v329, %v329
        %v338 = vpack.c.b16 %v330, %v330
        %v339 = vpack.c.b16 %v331, %v331
        %v340 = vpack.c.b16 %v332, %v332
        %vm341 = vsmask.f32 7424
        %v343 = vshrl.u32 %v309, 16
        %v345 = vshll.u32 %v309, 16
        %v347 = vrot.slane %v345, 1
        %v348 = vor.u32 %v343, %v347
        %v350 = vshll.u32 %v333, 16
        %v352 = vrot.slane %v350, 1
        %v353 = vsel %vm341, %v348, %v352
        %v355 = vshrl.u32 %v310, 16
        %v357 = vshll.u32 %v310, 16
        %v359 = vrot.slane %v357, 1
        %v360 = vor.u32 %v355, %v359
        %v362 = vshll.u32 %v334, 16
        %v364 = vrot.slane %v362, 1
        %v365 = vsel %vm341, %v360, %v364
        %v367 = vshrl.u32 %v311, 16
        %v369 = vshll.u32 %v311, 16
        %v371 = vrot.slane %v369, 1
        %v372 = vor.u32 %v367, %v371
        %v374 = vshll.u32 %v335, 16
        %v376 = vrot.slane %v374, 1
        %v377 = vsel %vm341, %v372, %v376
        %v379 = vshrl.u32 %v312, 16
        %v381 = vshll.u32 %v312, 16
        %v383 = vrot.slane %v381, 1
        %v384 = vor.u32 %v379, %v383
        %v386 = vshll.u32 %v336, 16
        %v388 = vrot.slane %v386, 1
        %v389 = vsel %vm341, %v384, %v388
        %v391 = vshrl.u32 %v313, 16
        %v393 = vshll.u32 %v313, 16
        %v395 = vrot.slane %v393, 1
        %v396 = vor.u32 %v391, %v395
        %v398 = vshll.u32 %v337, 16
        %v400 = vrot.slane %v398, 1
        %v401 = vsel %vm341, %v396, %v400
        %v403 = vshrl.u32 %v314, 16
        %v405 = vshll.u32 %v314, 16
        %v407 = vrot.slane %v405, 1
        %v408 = vor.u32 %v403, %v407
        %v410 = vshll.u32 %v338, 16
        %v412 = vrot.slane %v410, 1
        %v413 = vsel %vm341, %v408, %v412
        %v415 = vshrl.u32 %v315, 16
        %v417 = vshll.u32 %v315, 16
        %v419 = vrot.slane %v417, 1
        %v420 = vor.u32 %v415, %v419
        %v422 = vshll.u32 %v339, 16
        %v424 = vrot.slane %v422, 1
        %v425 = vsel %vm341, %v420, %v424
        %v427 = vshrl.u32 %v316, 16
        %v429 = vshll.u32 %v316, 16
        %v431 = vrot.slane %v429, 1
        %v432 = vor.u32 %v427, %v431
        %v434 = vshll.u32 %v340, 16
        %v436 = vrot.slane %v434, 1
        %v437 = vsel %vm341, %v432, %v436
        %438 = vrot.lane.b32.xlu0 %v353, 8
        %v439 = vpop.permute.xlu0 %438
        %440 = vrot.lane.b32.xlu0 %v365, 8
        %v441 = vpop.permute.xlu0 %440
        %442 = vrot.lane.b32.xlu0 %v377, 8
        %v443 = vpop.permute.xlu0 %442
        %444 = vrot.lane.b32.xlu0 %v389, 8
        %v445 = vpop.permute.xlu0 %444
        %446 = vrot.lane.b32.xlu0 %v401, 8
        %v447 = vpop.permute.xlu0 %446
        %448 = vrot.lane.b32.xlu0 %v413, 8
        %v449 = vpop.permute.xlu0 %448
        %450 = vrot.lane.b32.xlu0 %v425, 8
        %v451 = vpop.permute.xlu0 %450
        %452 = vrot.lane.b32.xlu0 %v437, 8
        %v453 = vpop.permute.xlu0 %452
        %vm454 = vcmask 1046528
        %v455 = vrot.slane %v309, 1
        %v456 = vrot.slane %v333, 1
        %v457 = vsel %vm454, %v455, %v456
        %v458 = vrot.slane %v310, 1
        %v459 = vrot.slane %v334, 1
        %v460 = vsel %vm454, %v458, %v459
        %v461 = vrot.slane %v311, 1
        %v462 = vrot.slane %v335, 1
        %v463 = vsel %vm454, %v461, %v462
        %v464 = vrot.slane %v312, 1
        %v465 = vrot.slane %v336, 1
        %v466 = vsel %vm454, %v464, %v465
        %v467 = vrot.slane %v313, 1
        %v468 = vrot.slane %v337, 1
        %v469 = vsel %vm454, %v467, %v468
        %v470 = vrot.slane %v314, 1
        %v471 = vrot.slane %v338, 1
        %v472 = vsel %vm454, %v470, %v471
        %v473 = vrot.slane %v315, 1
        %v474 = vrot.slane %v339, 1
        %v475 = vsel %vm454, %v473, %v474
        %v476 = vrot.slane %v316, 1
        %v477 = vrot.slane %v340, 1
        %v478 = vsel %vm454, %v476, %v477
        %479 = vrot.lane.b32.xlu0 %v457, 16
        %v480 = vpop.permute.xlu0 %479
        %481 = vrot.lane.b32.xlu0 %v460, 16
        %v482 = vpop.permute.xlu0 %481
        %483 = vrot.lane.b32.xlu0 %v463, 16
        %v484 = vpop.permute.xlu0 %483
        %485 = vrot.lane.b32.xlu0 %v466, 16
        %v486 = vpop.permute.xlu0 %485
        %487 = vrot.lane.b32.xlu0 %v469, 16
        %v488 = vpop.permute.xlu0 %487
        %489 = vrot.lane.b32.xlu0 %v472, 16
        %v490 = vpop.permute.xlu0 %489
        %491 = vrot.lane.b32.xlu0 %v475, 16
        %v492 = vpop.permute.xlu0 %491
        %493 = vrot.lane.b32.xlu0 %v478, 16
        %v494 = vpop.permute.xlu0 %493
        %v497 = vunpack.c.l.b16 %v271
        %v498 = vunpack.c.l.b16 %v272
        %v499 = vpack.c.b16 %v498, %v497
        %500 = vrot.lane.b32.xlu0 %v310, 24
        %v501 = vpop.permute.xlu0 %500
        %502 = vrot.lane.b32.xlu0 %v311, 24
        %v503 = vpop.permute.xlu0 %502
        %504 = vrot.lane.b32.xlu0 %v312, 24
        %v505 = vpop.permute.xlu0 %504
        %506 = vrot.lane.b32.xlu0 %v313, 24
        %v507 = vpop.permute.xlu0 %506
        %508 = vrot.lane.b32.xlu0 %v314, 24
        %v509 = vpop.permute.xlu0 %508
        %510 = vrot.lane.b32.xlu0 %v315, 24
        %v511 = vpop.permute.xlu0 %510
        %512 = vrot.lane.b32.xlu0 %v316, 24
        %v513 = vpop.permute.xlu0 %512
        %514 = vrot.lane.b32.xlu0 %v499, 24
        %v515 = vpop.permute.xlu0 %514
        %v517 = vunpack.c.l.b16 %v273
        %v518 = vpack.c.b16 %v517, %v517
        %v520 = vshrl.u32 %v499, 16
        %v522 = vshll.u32 %v499, 16
        %v524 = vrot.slane %v522, 1
        %v525 = vor.u32 %v520, %v524
        %v527 = vshll.u32 %v518, 16
        %v529 = vrot.slane %v527, 1
        %v530 = vsel %vm341, %v525, %v529
        %531 = vrot.lane.b32.xlu0 %v365, 32
        %v532 = vpop.permute.xlu0 %531
        %533 = vrot.lane.b32.xlu0 %v377, 32
        %v534 = vpop.permute.xlu0 %533
        %535 = vrot.lane.b32.xlu0 %v389, 32
        %v536 = vpop.permute.xlu0 %535
        %537 = vrot.lane.b32.xlu0 %v401, 32
        %v538 = vpop.permute.xlu0 %537
        %539 = vrot.lane.b32.xlu0 %v413, 32
        %v540 = vpop.permute.xlu0 %539
        %541 = vrot.lane.b32.xlu0 %v425, 32
        %v542 = vpop.permute.xlu0 %541
        %543 = vrot.lane.b32.xlu0 %v437, 32
        %v544 = vpop.permute.xlu0 %543
        %545 = vrot.lane.b32.xlu0 %v530, 32
        %v546 = vpop.permute.xlu0 %545
        %v547 = vrot.slane %v499, 1
        %v548 = vrot.slane %v518, 1
        %v549 = vsel %vm454, %v547, %v548
        %550 = vrot.lane.b32.xlu0 %v460, 40
        %v551 = vpop.permute.xlu0 %550
        %552 = vrot.lane.b32.xlu0 %v463, 40
        %v553 = vpop.permute.xlu0 %552
        %554 = vrot.lane.b32.xlu0 %v466, 40
        %v555 = vpop.permute.xlu0 %554
        %556 = vrot.lane.b32.xlu0 %v469, 40
        %v557 = vpop.permute.xlu0 %556
        %558 = vrot.lane.b32.xlu0 %v472, 40
        %v559 = vpop.permute.xlu0 %558
        %560 = vrot.lane.b32.xlu0 %v475, 40
        %v561 = vpop.permute.xlu0 %560
        %562 = vrot.lane.b32.xlu0 %v478, 40
        %v563 = vpop.permute.xlu0 %562
        %564 = vrot.lane.b32.xlu0 %v549, 40
        %v565 = vpop.permute.xlu0 %564
        %v568 = vunpack.c.l.b16 %v274
        %v569 = vunpack.c.l.b16 %v275
        %v570 = vpack.c.b16 %v569, %v568
        %571 = vrot.lane.b32.xlu0 %v311, 48
        %v572 = vpop.permute.xlu0 %571
        %573 = vrot.lane.b32.xlu0 %v312, 48
        %v574 = vpop.permute.xlu0 %573
        %575 = vrot.lane.b32.xlu0 %v313, 48
        %v576 = vpop.permute.xlu0 %575
        %577 = vrot.lane.b32.xlu0 %v314, 48
        %v578 = vpop.permute.xlu0 %577
        %579 = vrot.lane.b32.xlu0 %v315, 48
        %v580 = vpop.permute.xlu0 %579
        %581 = vrot.lane.b32.xlu0 %v316, 48
        %v582 = vpop.permute.xlu0 %581
        %583 = vrot.lane.b32.xlu0 %v499, 48
        %v584 = vpop.permute.xlu0 %583
        %585 = vrot.lane.b32.xlu0 %v570, 48
        %v586 = vpop.permute.xlu0 %585
        %v588 = vunpack.c.l.b16 %v276
        %v589 = vpack.c.b16 %v588, %v588
        %v591 = vshrl.u32 %v570, 16
        %v593 = vshll.u32 %v570, 16
        %v595 = vrot.slane %v593, 1
        %v596 = vor.u32 %v591, %v595
        %v598 = vshll.u32 %v589, 16
        %v600 = vrot.slane %v598, 1
        %v601 = vsel %vm341, %v596, %v600
        %602 = vrot.lane.b32.xlu0 %v377, 56
        %v603 = vpop.permute.xlu0 %602
        %604 = vrot.lane.b32.xlu0 %v389, 56
        %v605 = vpop.permute.xlu0 %604
        %606 = vrot.lane.b32.xlu0 %v401, 56
        %v607 = vpop.permute.xlu0 %606
        %608 = vrot.lane.b32.xlu0 %v413, 56
        %v609 = vpop.permute.xlu0 %608
        %610 = vrot.lane.b32.xlu0 %v425, 56
        %v611 = vpop.permute.xlu0 %610
        %612 = vrot.lane.b32.xlu0 %v437, 56
        %v613 = vpop.permute.xlu0 %612
        %614 = vrot.lane.b32.xlu0 %v530, 56
        %v615 = vpop.permute.xlu0 %614
        %616 = vrot.lane.b32.xlu0 %v601, 56
        %v617 = vpop.permute.xlu0 %616
        %v618 = vrot.slane %v570, 1
        %v619 = vrot.slane %v589, 1
        %v620 = vsel %vm454, %v618, %v619
        %621 = vrot.lane.b32.xlu0 %v463, 64
        %v622 = vpop.permute.xlu0 %621
        %623 = vrot.lane.b32.xlu0 %v466, 64
        %v624 = vpop.permute.xlu0 %623
        %625 = vrot.lane.b32.xlu0 %v469, 64
        %v626 = vpop.permute.xlu0 %625
        %627 = vrot.lane.b32.xlu0 %v472, 64
        %v628 = vpop.permute.xlu0 %627
        %629 = vrot.lane.b32.xlu0 %v475, 64
        %v630 = vpop.permute.xlu0 %629
        %631 = vrot.lane.b32.xlu0 %v478, 64
        %v632 = vpop.permute.xlu0 %631
        %633 = vrot.lane.b32.xlu0 %v549, 64
        %v634 = vpop.permute.xlu0 %633
        %635 = vrot.lane.b32.xlu0 %v620, 64
        %v636 = vpop.permute.xlu0 %635
        %vm637 = vcmask 64512
        %v639 = vsel %vm637, %v309, %v439
        %v641 = vsel %vm637, %v310, %v441
        %v643 = vsel %vm637, %v311, %v443
        %v645 = vsel %vm637, %v312, %v445
        %v647 = vsel %vm637, %v313, %v447
        %v649 = vsel %vm637, %v314, %v449
        %v651 = vsel %vm637, %v315, %v451
        %v653 = vsel %vm637, %v316, %v453
        %vm654 = vcmask 130048
        %v656 = vsel %vm654, %v639, %v480
        %v658 = vsel %vm654, %v641, %v482
        %v660 = vsel %vm654, %v643, %v484
        %v662 = vsel %vm654, %v645, %v486
        %v664 = vsel %vm654, %v647, %v488
        %v666 = vsel %vm654, %v649, %v490
        %v668 = vsel %vm654, %v651, %v492
        %v670 = vsel %vm654, %v653, %v494
        %vm671 = vcmask 195584
        %v673 = vsel %vm671, %v656, %v501
        %v675 = vsel %vm671, %v658, %v503
        %v677 = vsel %vm671, %v660, %v505
        %v679 = vsel %vm671, %v662, %v507
        %v681 = vsel %vm671, %v664, %v509
        %v683 = vsel %vm671, %v666, %v511
        %v685 = vsel %vm671, %v668, %v513
        %v687 = vsel %vm671, %v670, %v515
        %vm688 = vcmask 261120
        %v690 = vsel %vm688, %v673, %v532
        %v692 = vsel %vm688, %v675, %v534
        %v694 = vsel %vm688, %v677, %v536
        %v696 = vsel %vm688, %v679, %v538
        %v698 = vsel %vm688, %v681, %v540
        %v700 = vsel %vm688, %v683, %v542
        %v702 = vsel %vm688, %v685, %v544
        %v704 = vsel %vm688, %v687, %v546
        %vm705 = vcmask 326656
        %v707 = vsel %vm705, %v690, %v551
        %v709 = vsel %vm705, %v692, %v553
        %v711 = vsel %vm705, %v694, %v555
        %v713 = vsel %vm705, %v696, %v557
        %v715 = vsel %vm705, %v698, %v559
        %v717 = vsel %vm705, %v700, %v561
        %v719 = vsel %vm705, %v702, %v563
        %v721 = vsel %vm705, %v704, %v565
        %vm722 = vcmask 392192
        %v724 = vsel %vm722, %v707, %v572
        %v726 = vsel %vm722, %v709, %v574
        %v728 = vsel %vm722, %v711, %v576
        %v730 = vsel %vm722, %v713, %v578
        %v732 = vsel %vm722, %v715, %v580
        %v734 = vsel %vm722, %v717, %v582
        %v736 = vsel %vm722, %v719, %v584
        %v738 = vsel %vm722, %v721, %v586
        %vm739 = vcmask 457728
        %v741 = vsel %vm739, %v724, %v603
        %v743 = vsel %vm739, %v726, %v605
        %v745 = vsel %vm739, %v728, %v607
        %v747 = vsel %vm739, %v730, %v609
        %v749 = vsel %vm739, %v732, %v611
        %v751 = vsel %vm739, %v734, %v613
        %v753 = vsel %vm739, %v736, %v615
        %v755 = vsel %vm739, %v738, %v617
        %vm756 = vcmask 523264
        %v758 = vsel %vm756, %v741, %v622
        %v760 = vsel %vm756, %v743, %v624
        %v762 = vsel %vm756, %v745, %v626
        %v764 = vsel %vm756, %v747, %v628
        %v766 = vsel %vm756, %v749, %v630
        %v768 = vsel %vm756, %v751, %v632
        %v770 = vsel %vm756, %v753, %v634
        %v772 = vsel %vm756, %v755, %v636
        %v773 = vld [vmem:[%s1] sm:$0xf]
        %v774 = vld [vmem:[%s1 + $0x4] sm:$0xf]
        %v775 = vld [vmem:[%s1 + $0x8] sm:$0xf]
        %v776 = vld [vmem:[%s1 + $0xc] sm:$0xf]
        %v777 = vld [vmem:[%s1 + $0x10] sm:$0xf]
        %v778 = vld [vmem:[%s1 + $0x14] sm:$0xf]
        %v779 = vld [vmem:[%s1 + $0x18] sm:$0xf]
        %v780 = vld [vmem:[%s1 + $0x1c] sm:$0xf]
        %v781 = vld [vmem:[%s1 + $0x20] sm:$0xf]
        %v782 = vld [vmem:[%s2] sm:$0x1]
        %v784 = vlaneseq
        %v785 = vshrl.u32 %v784, 7
        %v786 = vsub.s32 0, %v785
        %v787 = vrot.slane %v782, %v786
        %v798 = vunpack.c.l.b16 %v773
        %v799 = vunpack.c.l.b16 %v774
        %v800 = vunpack.c.l.b16 %v775
        %v801 = vunpack.c.l.b16 %v776
        %v802 = vunpack.c.l.b16 %v777
        %v803 = vunpack.c.l.b16 %v778
        %v804 = vunpack.c.l.b16 %v779
        %v805 = vunpack.c.l.b16 %v780
        %v806 = vunpack.c.l.b16 %v781
        %v807 = vpack.c.b16 %v799, %v798
        %v808 = vpack.c.b16 %v801, %v800
        %v809 = vpack.c.b16 %v803, %v802
        %v810 = vpack.c.b16 %v805, %v804
        %v811 = vpack.c.b16 %v806, %v806
        %vm816 = vcmask 588800
        %v817 = vsel %vm816, %v758, 0
        %v819 = vsel %vm816, %v760, 0
        %v821 = vsel %vm816, %v762, 0
        %v823 = vsel %vm816, %v764, 0
        %v825 = vsel %vm816, %v766, 0
        %v827 = vsel %vm816, %v768, 0
        %v829 = vsel %vm816, %v770, 0
        %v831 = vsel %vm816, %v772, 0
        %vm833 = vcmask 1043456
        %v835 = vsel %vm833, %v811, 0
        %837 = vmatprep.subr.bf16.mxu0 0
        %838 = vmatpush1.bf16.msra.mxu0 0
        %839 = vmatprep.subr.bf16.mxu0 0
        %840 = vmatpush1.bf16.msra.mxu0 0
        %841 = vmatprep.subr.bf16.mxu0 0
        %842 = vmatpush1.bf16.msra.mxu0 0
        %843 = vmatprep.subr.bf16.mxu0 0
        %844 = vmatpush1.bf16.msra.mxu0 %v835
        %845 = vmatprep.subr.bf16.mxu0 0
        %846 = vmatpush1.bf16.msra.mxu0 %v810
        %847 = vmatprep.subr.bf16.mxu0 0
        %848 = vmatpush1.bf16.msra.mxu0 %v809
        %849 = vmatprep.subr.bf16.mxu0 0
        %850 = vmatpush1.bf16.msra.mxu0 %v808
        %851 = vmatprep.subr.bf16.mxu0 0
        %852 = vmatpush1.bf16.msra.mxu0 %v807
        %853 = vmatprep.subr.bf16.mxu0 0
        %854 = vmatpush2.bf16.msra.mxu0 0
        %855 = vmatprep.subr.bf16.mxu0 0
        %856 = vmatpush2.bf16.msra.mxu0 0
        %857 = vmatprep.subr.bf16.mxu0 0
        %858 = vmatpush2.bf16.msra.mxu0 0
        %859 = vmatprep.subr.bf16.mxu0 0
        %860 = vmatpush2.bf16.msra.mxu0 0
        %861 = vmatprep.subr.bf16.mxu0 0
        %862 = vmatpush2.bf16.msra.mxu0 0
        %863 = vmatprep.subr.bf16.mxu0 0
        %864 = vmatpush2.bf16.msra.mxu0 0
        %865 = vmatprep.subr.bf16.mxu0 0
        %866 = vmatpush2.bf16.msra.mxu0 0
        %867 = vmatprep.subr.bf16.mxu0 0
        %868 = vmatpush2.bf16.msra.mxu0 0
        %869 = vmatprep.mubr.bf16.mxu0 0
        %870 = vmatmul.mubr.bf16.gmra.mxu0 %v817
        %v871 = vpop.f32.mrf.mxu0
        %v872 = vadd.f32 %v787, %v871
        %v873 = vpop.f32.mrf.mxu0
        %v874 = vpop.f32.mrf.mxu0
        %v875 = vadd.f32 %v787, %v874
        %v876 = vpop.f32.mrf.mxu0
        %877 = vmatprep.mubr.bf16.mxu0 0
        %878 = vmatmul.mubr.bf16.gmra.mxu0 %v819
        %v879 = vpop.f32.mrf.mxu0
        %v880 = vadd.f32 %v787, %v879
        %v881 = vpop.f32.mrf.mxu0
        %v882 = vpop.f32.mrf.mxu0
        %v883 = vadd.f32 %v787, %v882
        %v884 = vpop.f32.mrf.mxu0
        %885 = vmatprep.mubr.bf16.mxu0 0
        %886 = vmatmul.mubr.bf16.gmra.mxu0 %v821
        %v887 = vpop.f32.mrf.mxu0
        %v888 = vadd.f32 %v787, %v887
        %v889 = vpop.f32.mrf.mxu0
        %v890 = vpop.f32.mrf.mxu0
        %v891 = vadd.f32 %v787, %v890
        %v892 = vpop.f32.mrf.mxu0
        %893 = vmatprep.mubr.bf16.mxu0 0
        %894 = vmatmul.mubr.bf16.gmra.mxu0 %v823
        %v895 = vpop.f32.mrf.mxu0
        %v896 = vadd.f32 %v787, %v895
        %v897 = vpop.f32.mrf.mxu0
        %v898 = vpop.f32.mrf.mxu0
        %v899 = vadd.f32 %v787, %v898
        %v900 = vpop.f32.mrf.mxu0
        %901 = vmatprep.mubr.bf16.mxu0 0
        %902 = vmatmul.mubr.bf16.gmra.mxu0 %v825
        %v903 = vpop.f32.mrf.mxu0
        %v904 = vadd.f32 %v787, %v903
        %v905 = vpop.f32.mrf.mxu0
        %v906 = vpop.f32.mrf.mxu0
        %v907 = vadd.f32 %v787, %v906
        %v908 = vpop.f32.mrf.mxu0
        %909 = vmatprep.mubr.bf16.mxu0 0
        %910 = vmatmul.mubr.bf16.gmra.mxu0 %v827
        %v911 = vpop.f32.mrf.mxu0
        %v912 = vadd.f32 %v787, %v911
        %v913 = vpop.f32.mrf.mxu0
        %v914 = vpop.f32.mrf.mxu0
        %v915 = vadd.f32 %v787, %v914
        %v916 = vpop.f32.mrf.mxu0
        %917 = vmatprep.mubr.bf16.mxu0 0
        %918 = vmatmul.mubr.bf16.gmra.mxu0 %v829
        %v919 = vpop.f32.mrf.mxu0
        %v920 = vadd.f32 %v787, %v919
        %v921 = vpop.f32.mrf.mxu0
        %v922 = vpop.f32.mrf.mxu0
        %v923 = vadd.f32 %v787, %v922
        %v924 = vpop.f32.mrf.mxu0
        %925 = vmatprep.mubr.bf16.mxu0 0
        %926 = vmatmul.mubr.bf16.gmra.mxu0 %v831
        %v927 = vpop.f32.mrf.mxu0
        %v928 = vadd.f32 %v787, %v927
        %v929 = vpop.f32.mrf.mxu0
        %v930 = vpop.f32.mrf.mxu0
        %v931 = vadd.f32 %v787, %v930
        %v932 = vpop.f32.mrf.mxu0
        %933 = vdwg.mxu0
        %v934 = vmax.f32 %v872, 0.0
        %v935 = vmax.f32 %v875, 0.0
        %v936 = vmax.f32 %v880, 0.0
        %v937 = vmax.f32 %v883, 0.0
        %v938 = vmax.f32 %v888, 0.0
        %v939 = vmax.f32 %v891, 0.0
        %v940 = vmax.f32 %v896, 0.0
        %v941 = vmax.f32 %v899, 0.0
        %v942 = vmax.f32 %v904, 0.0
        %v943 = vmax.f32 %v907, 0.0
        %v944 = vmax.f32 %v912, 0.0
        %v945 = vmax.f32 %v915, 0.0
        %v946 = vmax.f32 %v920, 0.0
        %v947 = vmax.f32 %v923, 0.0
        %v948 = vmax.f32 %v928, 0.0
        %v949 = vmax.f32 %v931, 0.0
        %v950 = vpack.c.bf16 %v935, %v934
        %v951 = vpack.c.bf16 %v937, %v936
        %v952 = vpack.c.bf16 %v939, %v938
        %v953 = vpack.c.bf16 %v941, %v940
        %v954 = vpack.c.bf16 %v943, %v942
        %v955 = vpack.c.bf16 %v945, %v944
        %v956 = vpack.c.bf16 %v947, %v946
        %v957 = vpack.c.bf16 %v949, %v948
        %v966 = vunpack.c.l.b16 %v950
        %v967 = vunpack.c.h.b16 %v950
        %v968 = vunpack.c.l.b16 %v951
        %v969 = vunpack.c.h.b16 %v951
        %v970 = vunpack.c.l.b16 %v952
        %v971 = vunpack.c.h.b16 %v952
        %v972 = vunpack.c.l.b16 %v953
        %v973 = vunpack.c.h.b16 %v953
        %v974 = vunpack.c.l.b16 %v954
        %v975 = vunpack.c.h.b16 %v954
        %v976 = vunpack.c.l.b16 %v955
        %v977 = vunpack.c.h.b16 %v955
        %v978 = vunpack.c.l.b16 %v956
        %v979 = vunpack.c.h.b16 %v956
        %v980 = vunpack.c.l.b16 %v957
        %v981 = vunpack.c.h.b16 %v957
        %v982 = vpack.c.b16 %v966, %v966
        %v983 = vpack.c.b16 %v967, %v967
        %v984 = vpack.c.b16 %v968, %v968
        %v985 = vpack.c.b16 %v969, %v969
        %v986 = vpack.c.b16 %v970, %v970
        %v987 = vpack.c.b16 %v971, %v971
        %v988 = vpack.c.b16 %v972, %v972
        %v989 = vpack.c.b16 %v973, %v973
        %v990 = vpack.c.b16 %v974, %v974
        %v991 = vpack.c.b16 %v975, %v975
        %v992 = vpack.c.b16 %v976, %v976
        %v993 = vpack.c.b16 %v977, %v977
        %v994 = vpack.c.b16 %v978, %v978
        %v995 = vpack.c.b16 %v979, %v979
        %v996 = vpack.c.b16 %v980, %v980
        %v997 = vpack.c.b16 %v981, %v981
        %vm1014 = vcmask 519168
        %1015 = vst.msk [vmem:[%s244] sm:$0xf] %vm1014, %v982
        %1016 = vst.msk [vmem:[%s244 + $0x4] sm:$0xf] %vm1014, %v983
        %1017 = vst.msk [vmem:[%s244 + $0x8] sm:$0xf] %vm1014, %v984
        %1018 = vst.msk [vmem:[%s244 + $0xc] sm:$0xf] %vm1014, %v985
        %1019 = vst.msk [vmem:[%s244 + $0x10] sm:$0xf] %vm1014, %v986
        %1020 = vst.msk [vmem:[%s244 + $0x14] sm:$0xf] %vm1014, %v987
        %1021 = vst.msk [vmem:[%s244 + $0x18] sm:$0xf] %vm1014, %v988
        %1022 = vst.msk [vmem:[%s244 + $0x1c] sm:$0xf] %vm1014, %v989
        %1023 = vst.msk [vmem:[%s244 + $0x20] sm:$0xf] %vm1014, %v990
        %1024 = vst.msk [vmem:[%s244 + $0x24] sm:$0xf] %vm1014, %v991
        %1025 = vst.msk [vmem:[%s244 + $0x28] sm:$0xf] %vm1014, %v992
        %1026 = vst.msk [vmem:[%s244 + $0x2c] sm:$0xf] %vm1014, %v993
        %1027 = vst.msk [vmem:[%s244 + $0x30] sm:$0xf] %vm1014, %v994
        %1028 = vst.msk [vmem:[%s244 + $0x34] sm:$0xf] %vm1014, %v995
        %1029 = vst.msk [vmem:[%s244 + $0x38] sm:$0xf] %vm1014, %v996
        %1030 = vst.msk [vmem:[%s244 + $0x3c] sm:$0xf] %vm1014, %v997
        %p1031 = scmp.eq.s32.totalorder %s24, 0
        // Predicated region
        $region33: #{tpu_custom_call.1} parent=31 // pred_check
          %p1032 = pneg %p1031
        $region34: #{tpu_custom_call.1} parent=31 // pred_check_branch
          %1034 = sbr.rel (%p1032) target = $region36
        $region35: #{tpu_custom_call.1} parent=31 // pred_region
          %1035 = vst.msk [vmem:[%s226] sm:$0xff] %vm756, 0.0
          %1036 = vst.msk [vmem:[%s226 + $0x8] sm:$0xff] %vm756, 0.0
          %1037 = vst.msk [vmem:[%s226 + $0x10] sm:$0xff] %vm756, 0.0
          %1038 = vst.msk [vmem:[%s226 + $0x18] sm:$0xff] %vm756, 0.0
          %1039 = vst.msk [vmem:[%s226 + $0x20] sm:$0xff] %vm756, 0.0
          %1040 = vst.msk [vmem:[%s226 + $0x28] sm:$0xff] %vm756, 0.0
          %1041 = vst.msk [vmem:[%s226 + $0x30] sm:$0xff] %vm756, 0.0
          %1042 = vst.msk [vmem:[%s226 + $0x38] sm:$0xff] %vm756, 0.0
        $region36: #{tpu_custom_call.1} parent=31 // pred_fallthru
          _
        %1043 = vxpose.xlu0.c.b16.start [1/8] %v950, 128
        %1044 = vxpose.xlu0.c.b16.cont [2/8] %v951, 128
        %1045 = vxpose.xlu0.c.b16.cont [3/8] %v952, 128
        %1046 = vxpose.xlu0.c.b16.cont [4/8] %v953, 128
        %1047 = vxpose.xlu0.c.b16.cont [5/8] %v954, 128
        %1048 = vxpose.xlu0.c.b16.cont [6/8] %v955, 128
        %1049 = vxpose.xlu0.c.b16.cont [7/8] %v956, 128
        %1050 = vxpose.xlu0.c.b16.end [8/8] %v957, 128
        %v1051 = vpop.trf.xlu0
        %v1052 = vpop.trf.xlu0
        %v1053 = vpop.trf.xlu0
        %v1054 = vpop.trf.xlu0
        %v1055 = vpop.trf.xlu0
        %v1056 = vpop.trf.xlu0
        %v1057 = vpop.trf.xlu0
        %v1058 = vpop.trf.xlu0
        %1059 = vmatprep.subr.bf16.mxu0 0
        %1060 = vmatpush1.bf16.msra.mxu0 %v957
        %1061 = vmatprep.subr.bf16.mxu0 0
        %1062 = vmatpush1.bf16.msra.mxu0 %v956
        %1063 = vmatprep.subr.bf16.mxu0 0
        %1064 = vmatpush1.bf16.msra.mxu0 %v955
        %1065 = vmatprep.subr.bf16.mxu0 0
        %1066 = vmatpush1.bf16.msra.mxu0 %v954
        %1067 = vmatprep.subr.bf16.mxu0 0
        %1068 = vmatpush1.bf16.msra.mxu0 %v953
        %1069 = vmatprep.subr.bf16.mxu0 0
        %1070 = vmatpush1.bf16.msra.mxu0 %v952
        %1071 = vmatprep.subr.bf16.mxu0 0
        %1072 = vmatpush1.bf16.msra.mxu0 %v951
        %1073 = vmatprep.subr.bf16.mxu0 0
        %1074 = vmatpush1.bf16.msra.mxu0 %v950
        %1075 = vmatprep.subr.bf16.mxu0 0
        %1076 = vmatpush2.bf16.msra.mxu0 0
        %1077 = vmatprep.subr.bf16.mxu0 0
        %1078 = vmatpush2.bf16.msra.mxu0 0
        %1079 = vmatprep.subr.bf16.mxu0 0
        %1080 = vmatpush2.bf16.msra.mxu0 0
        %1081 = vmatprep.subr.bf16.mxu0 0
        %1082 = vmatpush2.bf16.msra.mxu0 0
        %1083 = vmatprep.subr.bf16.mxu0 0
        %1084 = vmatpush2.bf16.msra.mxu0 0
        %1085 = vmatprep.subr.bf16.mxu0 0
        %1086 = vmatpush2.bf16.msra.mxu0 0
        %1087 = vmatprep.subr.bf16.mxu0 0
        %1088 = vmatpush2.bf16.msra.mxu0 0
        %1089 = vmatprep.subr.bf16.mxu0 0
        %1090 = vmatpush2.bf16.msra.mxu0 0
        %1091 = vmatprep.mubr.bf16.mxu0 0
        %1092 = vmatmul.mubr.bf16.gmra.mxu0 %v1051
        %v1093 = vpop.f32.mrf.mxu0
        %v1094 = vadd.f32 0.0, %v1093
        %v1095 = vpop.f32.mrf.mxu0
        %v1096 = vpop.f32.mrf.mxu0
        %v1097 = vadd.f32 0.0, %v1096
        %v1098 = vpop.f32.mrf.mxu0
        %1099 = vmatprep.mubr.bf16.mxu0 0
        %1100 = vmatmul.mubr.bf16.gmra.mxu0 %v1052
        %v1101 = vpop.f32.mrf.mxu0
        %v1102 = vadd.f32 0.0, %v1101
        %v1103 = vpop.f32.mrf.mxu0
        %v1104 = vpop.f32.mrf.mxu0
        %v1105 = vadd.f32 0.0, %v1104
        %v1106 = vpop.f32.mrf.mxu0
        %1107 = vmatprep.mubr.bf16.mxu0 0
        %1108 = vmatmul.mubr.bf16.gmra.mxu0 %v1053
        %v1109 = vpop.f32.mrf.mxu0
        %v1110 = vadd.f32 0.0, %v1109
        %v1111 = vpop.f32.mrf.mxu0
        %v1112 = vpop.f32.mrf.mxu0
        %v1113 = vadd.f32 0.0, %v1112
        %v1114 = vpop.f32.mrf.mxu0
        %1115 = vmatprep.mubr.bf16.mxu0 0
        %1116 = vmatmul.mubr.bf16.gmra.mxu0 %v1054
        %v1117 = vpop.f32.mrf.mxu0
        %v1118 = vadd.f32 0.0, %v1117
        %v1119 = vpop.f32.mrf.mxu0
        %v1120 = vpop.f32.mrf.mxu0
        %v1121 = vadd.f32 0.0, %v1120
        %v1122 = vpop.f32.mrf.mxu0
        %1123 = vdwg.mxu0
        %v1124 = vld [vmem:[%s226] sm:$0xff]
        %v1125 = vld [vmem:[%s226 + $0x8] sm:$0xff]
        %v1126 = vld [vmem:[%s226 + $0x10] sm:$0xff]
        %v1127 = vld [vmem:[%s226 + $0x18] sm:$0xff]
        %v1128 = vld [vmem:[%s226 + $0x20] sm:$0xff]
        %v1129 = vld [vmem:[%s226 + $0x28] sm:$0xff]
        %v1130 = vld [vmem:[%s226 + $0x30] sm:$0xff]
        %v1131 = vld [vmem:[%s226 + $0x38] sm:$0xff]
        %v1132 = vadd.f32 %v1124, %v1094
        %v1133 = vadd.f32 %v1125, %v1097
        %v1134 = vadd.f32 %v1126, %v1102
        %v1135 = vadd.f32 %v1127, %v1105
        %v1136 = vadd.f32 %v1128, %v1110
        %v1137 = vadd.f32 %v1129, %v1113
        %v1138 = vadd.f32 %v1130, %v1118
        %v1139 = vadd.f32 %v1131, %v1121
        %1140 = vst.msk [vmem:[%s226] sm:$0xff] %vm756, %v1132
        %1141 = vst.msk [vmem:[%s226 + $0x8] sm:$0xff] %vm756, %v1133
        %1142 = vst.msk [vmem:[%s226 + $0x10] sm:$0xff] %vm756, %v1134
        %1143 = vst.msk [vmem:[%s226 + $0x18] sm:$0xff] %vm756, %v1135
        %1144 = vst.msk [vmem:[%s226 + $0x20] sm:$0xff] %vm756, %v1136
        %1145 = vst.msk [vmem:[%s226 + $0x28] sm:$0xff] %vm756, %v1137
        %1146 = vst.msk [vmem:[%s226 + $0x30] sm:$0xff] %vm756, %v1138
        %1147 = vst.msk [vmem:[%s226 + $0x38] sm:$0xff] %vm756, %v1139
        %s1148 = smul.u32 16, %s24
        %p1149 = scmp.lt.s32.totalorder %s23, 3
        %s1150 = scalar_select %p1149, %s23, 3
        %p1151 = scmp.lt.s32.totalorder %s1148, 31
        %s1152 = scalar_select %p1151, %s1148, 31
        %s1153 = smul.addr %s1150, 32
        %s1154 = sadd.s32 %s1152, %s1153
        %s1155 = smul.addr %s1154, 4
        %s1156 = scalar_lea.vmem %s3, %s1155
        %s1157 = sand.u32 %s139, 1
        %s1158 = scalar_lea.sflag [#allocation3], %s1157
        %s1159 = sand.u32 %s139, 1
        %s1160 = smul.addr %s1159, 64
        %s1161 = scalar_lea.vmem [#allocation2], %s1160
        // Predicated region
        $region37: #{tpu_custom_call.1} parent=31 // pred_check
          %p1162 = pneg %p123
        $region38: #{tpu_custom_call.1} parent=31 // pred_check_branch
          %1164 = sbr.rel (%p1162) target = $region40
        $region39: #{tpu_custom_call.1} parent=31 // pred_region
          %s1165 = smul.u32 16, %s24
        $region40: #{tpu_custom_call.1} parent=31 // pred_fallthru
          _
        // Predicated region
        $region41: #{tpu_custom_call.1} parent=31 // pred_check
          %p1166 = pneg %p149
        $region42: #{tpu_custom_call.1} parent=31 // pred_check_branch
          %1168 = sbr.rel (%p1166) target = $region44
        $region43: #{tpu_custom_call.1} parent=31 // pred_region
          %s1170 = ssub.s32 1024, 1024
          %1171 = vsyncadd %s1158, %s1170
          %s1172 = smul.addr %s23, 8
          %s1173 = smul.addr %s1172, 128
          %s1174 = scalar_lea.hbm %s4, %s1173
          %s1175 = sshll.u32 %s1161, 4
          %s1176 = int_to_ptr.vmem [resolvable:$true] %s1175
          %1181 = dma.vmem_to_hbm [thread:$0]  %s1176, 1024, %s1174, %s1158, 128, 128, 8
        $region44: #{tpu_custom_call.1} parent=31 // pred_fallthru
          _
      $region32: #{tpu_custom_call.1} parent=5 // pred_fallthru
        _
      %p1182 = scmp.le.s32.totalorder 2, %s14
      // Predicated region
      $region45: #{tpu_custom_call.1} parent=5 // pred_check
        %p1183 = pneg %p1182
      $region46: #{tpu_custom_call.1} parent=5 // pred_check_branch
        %1185 = sbr.rel (%p1183) target = $region48
      $region47: #{tpu_custom_call.1} parent=5 // pred_region
        %s1186 = ssub.s32 %s14, 2
        // Predicated region
        $region49: #{tpu_custom_call.1} parent=47 // pred_check
          %p1187 = pneg %p129
        $region50: #{tpu_custom_call.1} parent=47 // pred_check_branch
          %1189 = sbr.rel (%p1187) target = $region52
        $region51: #{tpu_custom_call.1} parent=47 // pred_region
          %s1190 = smul.u32 16, %s26
          %p1191 = scmp.lt.s32.totalorder %s25, 3
          %s1192 = scalar_select %p1191, %s25, 3
          %p1193 = scmp.lt.s32.totalorder %s1190, 31
          %s1194 = scalar_select %p1193, %s1190, 31
          %s1195 = smul.addr %s1192, 32
          %s1196 = sadd.s32 %s1194, %s1195
          %s1197 = smul.addr %s1196, 4
          %s1198 = scalar_lea.vmem %s3, %s1197
        $region52: #{tpu_custom_call.1} parent=47 // pred_fallthru
          _
        // Predicated region
        $region53: #{tpu_custom_call.1} parent=47 // pred_check
          %p1199 = pneg %p155
        $region54: #{tpu_custom_call.1} parent=47 // pred_check_branch
          %1201 = sbr.rel (%p1199) target = $region56
        $region55: #{tpu_custom_call.1} parent=47 // pred_region
          %s1202 = sand.u32 %s140, 1
          %s1203 = scalar_lea.sflag [#allocation3], %s1202
          %s1204 = sand.u32 %s140, 1
          %s1205 = smul.addr %s1204, 64
          %s1206 = scalar_lea.vmem [#allocation2], %s1205
          %1207 = dma.done %s1203, 1024
        $region56: #{tpu_custom_call.1} parent=47 // pred_fallthru
          _
      $region48: #{tpu_custom_call.1} parent=5 // pred_fallthru
        _
    $region6: #{tpu_custom_call.1} parent=1 // loop_footer
      %s18 = sadd.s32 1, %s14
    $region7: #{tpu_custom_call.1} parent=1 // loop_footer_branch
      %13 = sbr.rel target = $region3
    $region8: #{tpu_custom_call.1} parent=1 // loop_exit
      _
    %1208 = vsyncpa [#allocation3], 1
    %s1209 = scalar_lea.sflag [#allocation3], 1
    %1210 = vsyncpa %s1209, 1

</llo_original>
